<compile_context>
chip_gen: v7x
topology: tpu7x:2x2x1
jax: 0.10.0
libtpu: 0.0.40
codegen_flags: <defaults>
</compile_context>

<pallas_src>
import jax
import jax.numpy as jnp
from jax.experimental import pallas as pl
from jax.experimental.pallas import tpu as pltpu


def _round_up(x, m):
    return ((x + m - 1) // m) * m


def _cdiv(a, b):
    return -(-a // b)


# ----------------------------- kernels ---------------------------------------------------


def _fh_kernel_f32(x_ref, w_ref, b_ref, o_ref):
    # x_ref: [tm, tk]  w_ref: [tk, tn]  b_ref: [1, tn]  o_ref: [tm, tn] (f32, resident over k)
    k = pl.program_id(2)

    @pl.when(k == 0)
    def _():
        # Initialize the resident output tile with the bias -> bias added exactly once.
        o_ref[...] = jnp.broadcast_to(b_ref[...], o_ref.shape)

    o_ref[...] += jnp.dot(x_ref[...], w_ref[...], preferred_element_type=jnp.float32)
    # TODO(synk): nn.Dropout is identity in eval / p=0; training-time dropout would need
    # pltpu.prng_seed / prng_random_bits masking here.


def _fh_kernel_acc(x_ref, w_ref, b_ref, o_ref, acc_ref):
    # Low-precision output path: f32 VMEM accumulator, cast + store on the last k step only.
    k = pl.program_id(2)

    @pl.when(k == 0)
    def _():
        acc_ref[...] = jnp.broadcast_to(b_ref[...].astype(jnp.float32), acc_ref.shape)

    acc_ref[...] += jnp.dot(x_ref[...], w_ref[...], preferred_element_type=jnp.float32)

    @pl.when(k == pl.num_programs(2) - 1)
    def _():
        o_ref[...] = acc_ref[...].astype(o_ref.dtype)


# ----------------------------- parameter prep (once, at "module init") -------------------


def prepare_flatten_head_params(weight, bias, *, lane=128):
    """One-time prep: transpose the Linear weight to [nf, T_pad] and zero-pad
    target_window up to a lane multiple so the kernel's output stores are lane-dense."""
    T, nf = weight.shape
    assert bias.shape == (T,)
    T_pad = _round_up(T, lane)
    w_t = weight.T                                   # [nf, T] -> contiguous (tk, tn) tiles
    if T_pad != T:
        w_t = jnp.pad(w_t, ((0, 0), (0, T_pad - T)))
        bias = jnp.pad(bias, (0, T_pad - T))
    return w_t, bias.reshape(1, T_pad)


# ----------------------------- tile selection ---------------------------------------------


def _pick_tk(nf, tk_target):
    """Largest 256- (then 128-) granule tile that divides nf exactly -> no activation pad."""
    for mult in (256, 128):
        c = (min(tk_target, nf) // mult) * mult
        while c >= mult:
            if nf % c == 0:
                return c
            c -= mult
    # No lane-aligned divisor: take the whole reduction in one block (block == full dim).
    return nf


def _pick_tn(T_pad, tn_target):
    if T_pad <= tn_target:
        return T_pad
    c = (tn_target // 128) * 128
    while c >= 128:
        if T_pad % c == 0:
            return c
        c -= 128
    return 128


# ----------------------------- wrapper -----------------------------------------------------


def flatten_head(x, w_t, bias2d, target_window, *,
                 tm_target=1024, tk_target=512, tn_target=512):
    """x: [B, n_vars, d_model, patch_num]; (w_t, bias2d) from prepare_flatten_head_params."""
    B, n_vars, d_model, patch_num = x.shape
    nf = d_model * patch_num
    nf_w, T_pad = w_t.shape
    assert nf_w == nf, "prepared weight does not match d_model*patch_num"
    assert bias2d.shape == (1, T_pad)
    T = target_window
    assert T <= T_pad

    M = B * n_vars
    x2d = x.reshape(M, nf)                           # Flatten(start_dim=-2), no copy needed

    # --- tile selection ---------------------------------------------------------------
    # Reduction tile: exact divisor of nf (256-granule preferred for v6e/v7x MXU depth).
    tk = _pick_tk(nf, tk_target)
    # Balanced row tiles (avoid e.g. M=300 padding to 512); ragged last block is masked
    # by Pallas and its garbage rows never land inside the [0, M) output.
    n_i = max(1, _cdiv(M, tm_target))
    tm = _cdiv(M, n_i)
    tm = _round_up(tm, 8) if n_i > 1 else M          # block == full dim is always legal
    n_i = _cdiv(M, tm)
    # Output-column tile: lane-dense, divides T_pad; second "parallel" axis for v7x 2 TCs.
    tn = _pick_tn(T_pad, tn_target)
    n_j = T_pad // tn
    n_k = nf // tk
    grid = (n_i, n_j, n_k)

    out_is_f32 = x2d.dtype == jnp.float32
    kernel = _fh_kernel_f32 if out_is_f32 else _fh_kernel_acc
    scratch = [] if out_is_f32 else [pltpu.VMEM((tm, tn), jnp.float32)]

    # --- VMEM budget & cost estimate ----------------------------------------------------
    itemsize = x2d.dtype.itemsize
    vmem_bytes = (
        2 * (tm * tk + tk * tn + tn) * itemsize      # double-buffered inputs
        + 2 * tm * tn * itemsize                     # double-buffered output
        + (0 if out_is_f32 else tm * tn * 4)         # f32 accumulator (low-precision out)
    )
    vmem_limit = int(min(48 * 2**20, max(2 * vmem_bytes, 16 * 2**20)))

    cost = pl.CostEstimate(
        flops=2 * M * nf * T_pad,
        transcendentals=0,
        bytes_accessed=itemsize * (n_j * M * nf          # activations, re-read per j tile
                                   + n_i * nf * T_pad    # weight, re-read per i tile
                                   + M * T_pad),         # output
    )

    out2d = pl.pallas_call(
        kernel,
        out_shape=jax.ShapeDtypeStruct((M, T_pad), x.dtype),
        grid_spec=pltpu.PrefetchScalarGridSpec(
            num_scalar_prefetch=0,
            grid=grid,
            in_specs=[
                pl.BlockSpec((tm, tk), lambda i, j, k: (i, k)),   # activations
                pl.BlockSpec((tk, tn), lambda i, j, k: (k, j)),   # weight [nf, T_pad]
                pl.BlockSpec((1, tn), lambda i, j, k: (0, j)),    # bias   [1, T_pad]
            ],
            out_specs=pl.BlockSpec((tm, tn), lambda i, j, k: (i, j)),
            scratch_shapes=scratch,
        ),
        compiler_params=pltpu.CompilerParams(
            dimension_semantics=("parallel", "parallel", "arbitrary"),
            vmem_limit_bytes=vmem_limit,
        ),
        cost_estimate=cost,
    )(x2d, w_t, bias2d)

    # Strip lane padding and restore [B, n_vars, target_window].
    return out2d[:, :T].reshape(B, n_vars, T)


# ----------------------------- demo / self-check -------------------------------------------

if __name__ == "__main__":
    # Small shapes consistent with the module (time-series forecasting head).
    B, n_vars, d_model, patch_num = 2, 4, 16, 16
    nf = d_model * patch_num            # 256
    target_window = 96                  # not a multiple of 128 -> exercises lane padding

    key = jax.random.PRNGKey(0)
    kx, kw, kb = jax.random.split(key, 3)

    x = jax.random.normal(kx, (B, n_vars, d_model, patch_num), dtype=jnp.float32)
    # Deterministic Linear params (synthetic init, ~torch default scale 1/sqrt(nf)).
    weight = jax.random.uniform(kw, (target_window, nf), dtype=jnp.float32,
                                minval=-1.0, maxval=1.0) / jnp.sqrt(jnp.float32(nf))
    bias = jax.random.uniform(kb, (target_window,), dtype=jnp.float32,
                              minval=-1.0, maxval=1.0) / jnp.sqrt(jnp.float32(nf))

    # Reference in plain JAX.
    ref = x.reshape(B, n_vars, nf) @ weight.T + bias

    # One-time parameter prep (would live at module init in a real model).
    w_t, b2d = prepare_flatten_head_params(weight, bias)

    # 1) Default tiling: single reduction step, direct accumulation into the output block.
    out = jax.block_until_ready(flatten_head(x, w_t, b2d, target_window))
    assert out.shape == (B, n_vars, target_window)
    assert jnp.allclose(out, ref, atol=1e-5, rtol=1e-5)

    # 2) tk_target=128 forces a 2-step reduction grid (exercises the resident accumulator).
    out2 = jax.block_until_ready(flatten_head(x, w_t, b2d, target_window, tk_target=128))
    assert jnp.allclose(out2, ref, atol=1e-5, rtol=1e-5)

    # 3) bf16 inputs exercise the f32-scratch epilogue path (looser tolerance).
    w_t16, b2d16 = prepare_flatten_head_params(weight.astype(jnp.bfloat16),
                                               bias.astype(jnp.bfloat16))
    out3 = jax.block_until_ready(
        flatten_head(x.astype(jnp.bfloat16), w_t16, b2d16, target_window, tk_target=128))
    assert jnp.allclose(out3.astype(jnp.float32), ref, atol=5e-2, rtol=5e-2)

    print("KERNEL_OK")
</pallas_src>

<mosaic_0001>
module attributes {stable_mosaic.version = 11 : i64} {
  func.func @_fh_kernel_f32(%arg0: i32, %arg1: i32, %arg2: i32, %arg3: memref<8x256xf32, #tpu.memory_space<vmem>>, %arg4: memref<256x128xf32, #tpu.memory_space<vmem>>, %arg5: memref<1x128xf32, #tpu.memory_space<vmem>>, %arg6: memref<8x128xf32, #tpu.memory_space<vmem>>) attributes {dimension_semantics = [#tpu.dimension_semantics<parallel>, #tpu.dimension_semantics<parallel>, #tpu.dimension_semantics<arbitrary>], iteration_bounds = array<i64: 1, 1, 1>, scalar_prefetch = 0 : i64, scratch_operands = 0 : i64, tpu.core_type = #tpu.core_type<tc>, window_params = [{transform_indices = @transform_0, window_bounds = array<i64: 8, 256>}, {transform_indices = @transform_1, window_bounds = array<i64: 256, 128>}, {transform_indices = @transform_2, window_bounds = array<i64: 1, 128>}, {transform_indices = @transform_3, window_bounds = array<i64: 8, 128>}]} {
    %c0_i32 = arith.constant 0 : i32
    %0 = arith.cmpi eq, %arg2, %c0_i32 : i32
    %1 = arith.extui %0 : i1 to i32
    %c0_i32_0 = arith.constant 0 : i32
    %2 = arith.cmpi ne, %1, %c0_i32_0 : i32
    scf.if %2 {
      %c0_8 = arith.constant 0 : index
      %c0_9 = arith.constant 0 : index
      %9 = vector.load %arg5[%c0_8, %c0_9] : memref<1x128xf32, #tpu.memory_space<vmem>>, vector<1x128xf32>
      %10 = vector.shape_cast %9 : vector<1x128xf32> to vector<1x128xf32>
      %11 = vector.broadcast %10 : vector<1x128xf32> to vector<8x128xf32>
      %c0_10 = arith.constant 0 : index
      %c0_11 = arith.constant 0 : index
      %12 = vector.load %arg6[%c0_10, %c0_11] : memref<8x128xf32, #tpu.memory_space<vmem>>, vector<8x128xf32>
      tpu.vector_store %arg6[%c0_10, %c0_11], %11 {strides = array<i32>} : memref<8x128xf32, #tpu.memory_space<vmem>>, vector<8x128xf32>,
    } else {
    }
    %c0 = arith.constant 0 : index
    %c0_1 = arith.constant 0 : index
    %3 = vector.load %arg6[%c0, %c0_1] : memref<8x128xf32, #tpu.memory_space<vmem>>, vector<8x128xf32>
    %c0_2 = arith.constant 0 : index
    %c0_3 = arith.constant 0 : index
    %4 = vector.load %arg3[%c0_2, %c0_3] : memref<8x256xf32, #tpu.memory_space<vmem>>, vector<8x256xf32>
    %c0_4 = arith.constant 0 : index
    %c0_5 = arith.constant 0 : index
    %5 = vector.load %arg4[%c0_4, %c0_5] : memref<256x128xf32, #tpu.memory_space<vmem>>, vector<256x128xf32>
    %cst = arith.constant dense<0.000000e+00> : vector<8x128xf32>
    %6 = tpu.matmul %4, %5, %cst {dimension_numbers = #tpu.dot_dimension_numbers<[1], [0], [0], [1], [0, 0, 1, 1], [], []>} : vector<8x256xf32>, vector<256x128xf32>, vector<8x128xf32> -> vector<8x128xf32>
    %7 = arith.addf %3, %6 : vector<8x128xf32>
    %c0_6 = arith.constant 0 : index
    %c0_7 = arith.constant 0 : index
    %8 = vector.load %arg6[%c0_6, %c0_7] : memref<8x128xf32, #tpu.memory_space<vmem>>, vector<8x128xf32>
    tpu.vector_store %arg6[%c0_6, %c0_7], %7 {strides = array<i32>} : memref<8x128xf32, #tpu.memory_space<vmem>>, vector<8x128xf32>,
    return
  }
  func.func @transform_0(%arg0: i32, %arg1: i32, %arg2: i32) -> (i32, i32) {
    %c0_i32 = arith.constant 0 : i32
    return %arg0, %arg2 : i32, i32
  }
  func.func @transform_1(%arg0: i32, %arg1: i32, %arg2: i32) -> (i32, i32) {
    %c0_i32 = arith.constant 0 : i32
    return %arg2, %arg1 : i32, i32
  }
  func.func @transform_2(%arg0: i32, %arg1: i32, %arg2: i32) -> (i32, i32) {
    %c0_i32 = arith.constant 0 : i32
    %c0_i32_0 = arith.constant 0 : i32
    return %c0_i32, %arg1 : i32, i32
  }
  func.func @transform_3(%arg0: i32, %arg1: i32, %arg2: i32) -> (i32, i32) {
    %c0_i32 = arith.constant 0 : i32
    return %arg0, %arg1 : i32, i32
  }
}

</mosaic_0001>

<llo_original>
// kernel: tpu_custom_call.1
$region0: #{tpu_custom_call.1}
  #allocation0 [shape = 'u32[]', space=smem, size = 0x4, offset = 0x4, fixed_abs, tag = 'smem constant byte address 0x4 - core index']
  #allocation1 [shape = 'u32[144,128]{1,0:T(1,128)}', space=vmem, size = 0x12000, scoped, tag = 'internal scratch']
  %s0 = inlined_call_operand.hbm [shape: f32[8,256], index: 0, kind: input, shape index: {}]
  %s1 = inlined_call_operand.hbm [shape: f32[256,128], index: 1, kind: input, shape index: {}]
  %s2 = inlined_call_operand.vmem [shape: f32[1,128], index: 2, kind: input, shape index: {}]
  %s3 = inlined_call_operand.hbm [shape: f32[8,128], index: 3, kind: output, shape index: {}]
  %s4 = sld [smem:[#allocation0]]
  $region34: #{tpu_custom_call.1} parent=0
    _
  %s6 = ssub.s32 1, %s4
  %s7 = scalar_select 0, %s6, %s4
  $region1: #{tpu_custom_call.1} parent=0
    #allocation2 [shape = 'u8[8192]{0}', space=vmem, size = 0x2000, scoped, tag = 'input window, operand 0, single buffered']
    #allocation3 [shape = 's32[1]{0}', space=sflag, size = 0x4, scoped, tag = 'scoped memory for tpu_custom_call.1']
    #allocation4 [shape = 's32[1]{0}', space=sflag, size = 0x4, scoped, tag = 'scoped memory for tpu_custom_call.1']
    #allocation5 [shape = 'u8[131072]{0}', space=vmem, size = 0x20000, scoped, tag = 'input window, operand 1, single buffered']
    #allocation6 [shape = 's32[1]{0}', space=sflag, size = 0x4, scoped, tag = 'scoped memory for tpu_custom_call.1']
    #allocation7 [shape = 'u8[4096]{0}', space=vmem, size = 0x1000, scoped, tag = 'output window, operand 0, single buffered']
    %8 = vsyncpa [#allocation3], 0
    %9 = vsyncpa [#allocation6], 0
    %10 = vsyncpa [#allocation4], 0
    // Predicated region
    $region2: #{tpu_custom_call.1} parent=1 // pred_check
      _
    $region3: #{tpu_custom_call.1} parent=1 // pred_check_branch
      %12 = sbr.rel (0) target = $region5
    $region4: #{tpu_custom_call.1} parent=1 // pred_region
      %s14 = ssub.s32 256, 256
      %15 = vsyncadd [#allocation3], %s14
      %s17 = sshll.u32 [#allocation2], 4
      %s18 = int_to_ptr.vmem [resolvable:$true] %s17
      %20 = dma.hbm_to_vmem [thread:$0]  %s0, 256, %s18, [#allocation3]
    $region5: #{tpu_custom_call.1} parent=1 // pred_fallthru
      _
    // Predicated region
    $region6: #{tpu_custom_call.1} parent=1 // pred_check
      _
    $region7: #{tpu_custom_call.1} parent=1 // pred_check_branch
      %22 = sbr.rel (0) target = $region9
    $region8: #{tpu_custom_call.1} parent=1 // pred_region
      %s24 = ssub.s32 4096, 4096
      %25 = vsyncadd [#allocation6], %s24
      %s26 = sshll.u32 [#allocation5], 4
      %s27 = int_to_ptr.vmem [resolvable:$true] %s26
      %32 = dma.hbm_to_vmem [thread:$0]  %s1, 4096, %s27, [#allocation6], 128, 128, 8
    $region9: #{tpu_custom_call.1} parent=1 // pred_fallthru
      _
    // Predicated region
    $region10: #{tpu_custom_call.1} parent=1 // pred_check
      _
    $region11: #{tpu_custom_call.1} parent=1 // pred_check_branch
      %34 = sbr.rel (0) target = $region13
    $region12: #{tpu_custom_call.1} parent=1 // pred_region
      _
    $region13: #{tpu_custom_call.1} parent=1 // pred_fallthru
      _
    // Predicated region
    $region14: #{tpu_custom_call.1} parent=1 // pred_check
      _
    $region15: #{tpu_custom_call.1} parent=1 // pred_check_branch
      %36 = sbr.rel (0) target = $region17
    $region16: #{tpu_custom_call.1} parent=1 // pred_region
      %37 = dma.done [#allocation3], 256
    $region17: #{tpu_custom_call.1} parent=1 // pred_fallthru
      _
    // Predicated region
    $region18: #{tpu_custom_call.1} parent=1 // pred_check
      _
    $region19: #{tpu_custom_call.1} parent=1 // pred_check_branch
      %39 = sbr.rel (0) target = $region21
    $region20: #{tpu_custom_call.1} parent=1 // pred_region
      %40 = dma.done [#allocation6], 4096
    $region21: #{tpu_custom_call.1} parent=1 // pred_fallthru
      _
    %p41 = scmp.eq.s32.totalorder 0, 0
    // Predicated region
    $region22: #{tpu_custom_call.1} parent=1 // pred_check
      %p42 = pneg %p41
    $region23: #{tpu_custom_call.1} parent=1 // pred_check_branch
      %44 = sbr.rel (%p42) target = $region25
    $region24: #{tpu_custom_call.1} parent=1 // pred_region
      %v45 = vld [vmem:[%s2] sm:$0x1]
      %v47 = vlaneseq
      %v48 = vshrl.u32 %v47, 7
      %v49 = vsub.s32 0, %v48
      %v50 = vrot.slane %v45, %v49
      %52 = vst [vmem:[#allocation7] sm:$0xff] %v50
    $region25: #{tpu_custom_call.1} parent=1 // pred_fallthru
      _
    %v53 = vld [vmem:[#allocation7] sm:$0xff]
    %v54 = vld [vmem:[#allocation2] sm:$0xff]
    %v55 = vld [vmem:[#allocation2 + $0x8] sm:$0xff]
    %v56 = vld [vmem:[#allocation5] sm:$0xff]
    %v57 = vld [vmem:[#allocation5 + $0x8] sm:$0xff]
    %v58 = vld [vmem:[#allocation5 + $0x10] sm:$0xff]
    %v59 = vld [vmem:[#allocation5 + $0x18] sm:$0xff]
    %v60 = vld [vmem:[#allocation5 + $0x20] sm:$0xff]
    %v61 = vld [vmem:[#allocation5 + $0x28] sm:$0xff]
    %v62 = vld [vmem:[#allocation5 + $0x30] sm:$0xff]
    %v63 = vld [vmem:[#allocation5 + $0x38] sm:$0xff]
    %v64 = vld [vmem:[#allocation5 + $0x40] sm:$0xff]
    %v65 = vld [vmem:[#allocation5 + $0x48] sm:$0xff]
    %v66 = vld [vmem:[#allocation5 + $0x50] sm:$0xff]
    %v67 = vld [vmem:[#allocation5 + $0x58] sm:$0xff]
    %v68 = vld [vmem:[#allocation5 + $0x60] sm:$0xff]
    %v69 = vld [vmem:[#allocation5 + $0x68] sm:$0xff]
    %v70 = vld [vmem:[#allocation5 + $0x70] sm:$0xff]
    %v71 = vld [vmem:[#allocation5 + $0x78] sm:$0xff]
    %v72 = vld [vmem:[#allocation5 + $0x80] sm:$0xff]
    %v73 = vld [vmem:[#allocation5 + $0x88] sm:$0xff]
    %v74 = vld [vmem:[#allocation5 + $0x90] sm:$0xff]
    %v75 = vld [vmem:[#allocation5 + $0x98] sm:$0xff]
    %v76 = vld [vmem:[#allocation5 + $0xa0] sm:$0xff]
    %v77 = vld [vmem:[#allocation5 + $0xa8] sm:$0xff]
    %v78 = vld [vmem:[#allocation5 + $0xb0] sm:$0xff]
    %v79 = vld [vmem:[#allocation5 + $0xb8] sm:$0xff]
    %v80 = vld [vmem:[#allocation5 + $0xc0] sm:$0xff]
    %v81 = vld [vmem:[#allocation5 + $0xc8] sm:$0xff]
    %v82 = vld [vmem:[#allocation5 + $0xd0] sm:$0xff]
    %v83 = vld [vmem:[#allocation5 + $0xd8] sm:$0xff]
    %v84 = vld [vmem:[#allocation5 + $0xe0] sm:$0xff]
    %v85 = vld [vmem:[#allocation5 + $0xe8] sm:$0xff]
    %v86 = vld [vmem:[#allocation5 + $0xf0] sm:$0xff]
    %v87 = vld [vmem:[#allocation5 + $0xf8] sm:$0xff]
    %88 = vmatprep.subr.mxu0 0.0
    %89 = vmatpush1.msra.mxu0 %v56
    %90 = vmatprep.subr.mxu0 0.0
    %91 = vmatpush1.msra.mxu0 %v57
    %92 = vmatprep.subr.mxu0 0.0
    %93 = vmatpush1.msra.mxu0 %v58
    %94 = vmatprep.subr.mxu0 0.0
    %95 = vmatpush1.msra.mxu0 %v59
    %96 = vmatprep.subr.mxu0 0.0
    %97 = vmatpush1.msra.mxu0 %v60
    %98 = vmatprep.subr.mxu0 0.0
    %99 = vmatpush1.msra.mxu0 %v61
    %100 = vmatprep.subr.mxu0 0.0
    %101 = vmatpush1.msra.mxu0 %v62
    %102 = vmatprep.subr.mxu0 0.0
    %103 = vmatpush1.msra.mxu0 %v63
    %104 = vmatprep.subr.mxu0 0.0
    %105 = vmatpush1.msra.mxu0 %v64
    %106 = vmatprep.subr.mxu0 0.0
    %107 = vmatpush1.msra.mxu0 %v65
    %108 = vmatprep.subr.mxu0 0.0
    %109 = vmatpush1.msra.mxu0 %v66
    %110 = vmatprep.subr.mxu0 0.0
    %111 = vmatpush1.msra.mxu0 %v67
    %112 = vmatprep.subr.mxu0 0.0
    %113 = vmatpush1.msra.mxu0 %v68
    %114 = vmatprep.subr.mxu0 0.0
    %115 = vmatpush1.msra.mxu0 %v69
    %116 = vmatprep.subr.mxu0 0.0
    %117 = vmatpush1.msra.mxu0 %v70
    %118 = vmatprep.subr.mxu0 0.0
    %119 = vmatpush1.msra.mxu0 %v71
    %120 = vmatprep.subr.mxu0 0.0
    %121 = vmatpush1.msra.mxu0 %v72
    %122 = vmatprep.subr.mxu0 0.0
    %123 = vmatpush1.msra.mxu0 %v73
    %124 = vmatprep.subr.mxu0 0.0
    %125 = vmatpush1.msra.mxu0 %v74
    %126 = vmatprep.subr.mxu0 0.0
    %127 = vmatpush1.msra.mxu0 %v75
    %128 = vmatprep.subr.mxu0 0.0
    %129 = vmatpush1.msra.mxu0 %v76
    %130 = vmatprep.subr.mxu0 0.0
    %131 = vmatpush1.msra.mxu0 %v77
    %132 = vmatprep.subr.mxu0 0.0
    %133 = vmatpush1.msra.mxu0 %v78
    %134 = vmatprep.subr.mxu0 0.0
    %135 = vmatpush1.msra.mxu0 %v79
    %136 = vmatprep.subr.mxu0 0.0
    %137 = vmatpush1.msra.mxu0 %v80
    %138 = vmatprep.subr.mxu0 0.0
    %139 = vmatpush1.msra.mxu0 %v81
    %140 = vmatprep.subr.mxu0 0.0
    %141 = vmatpush1.msra.mxu0 %v82
    %142 = vmatprep.subr.mxu0 0.0
    %143 = vmatpush1.msra.mxu0 %v83
    %144 = vmatprep.subr.mxu0 0.0
    %145 = vmatpush1.msra.mxu0 %v84
    %146 = vmatprep.subr.mxu0 0.0
    %147 = vmatpush1.msra.mxu0 %v85
    %148 = vmatprep.subr.mxu0 0.0
    %149 = vmatpush1.msra.mxu0 %v86
    %150 = vmatprep.subr.mxu0 0.0
    %151 = vmatpush1.msra.mxu0 %v87
    %152 = vmatprep.mubr.f32.mxu0 %v55
    %153 = vmatmul.mubr.f32.gmra.mrb[0].mxu0 %v54
    %v154 = vpop.f32.mrb[0].mxu0
    %v155 = vadd.f32 0.0, %v154
    %v156 = vpop.f32.mrb[0].mxu0
    %157 = vdwg.mxu0
    %v158 = vadd.f32 %v53, %v155
    %159 = vst [vmem:[#allocation7] sm:$0xff] %v158
    // Predicated region
    $region26: #{tpu_custom_call.1} parent=1 // pred_check
      _
    $region27: #{tpu_custom_call.1} parent=1 // pred_check_branch
      %161 = sbr.rel (0) target = $region29
    $region28: #{tpu_custom_call.1} parent=1 // pred_region
      %s163 = ssub.s32 128, 128
      %164 = vsyncadd [#allocation4], %s163
      %s166 = sshll.u32 [#allocation7], 4
      %s167 = int_to_ptr.vmem [resolvable:$true] %s166
      %169 = dma.vmem_to_hbm [thread:$0]  %s167, 128, %s3, [#allocation4]
    $region29: #{tpu_custom_call.1} parent=1 // pred_fallthru
      _
    // Predicated region
    $region30: #{tpu_custom_call.1} parent=1 // pred_check
      _
    $region31: #{tpu_custom_call.1} parent=1 // pred_check_branch
      %171 = sbr.rel (0) target = $region33
    $region32: #{tpu_custom_call.1} parent=1 // pred_region
      %172 = dma.done [#allocation4], 128
    $region33: #{tpu_custom_call.1} parent=1 // pred_fallthru
      _
    %173 = vsyncpa [#allocation3], 1
    %174 = vsyncpa [#allocation6], 1
    %175 = vsyncpa [#allocation4], 1

</llo_original>
